<compile_context>
chip_gen: v7x
topology: tpu7x:2x2x1
jax: 0.10.0
libtpu: 0.0.40
codegen_flags: <defaults>
</compile_context>

<pallas_src>
import math

import jax
import jax.numpy as jnp
from jax.experimental import pallas as pl
from jax.experimental.pallas import tpu as pltpu


# ---------------------------------------------------------------------------
# Kernels (close over Python ints only — no captured jnp constants)
# ---------------------------------------------------------------------------

def _make_reduce_kernel(tile_n: int, n_rows: int):
    """Fused batch sum + sum-of-squares.

    Grid: (cdiv(n_rows, tile_n),) marked "arbitrary".  The (2, F) output block
    has a constant index map, so it stays resident in VMEM and acts as the
    accumulator (row 0 = sum, row 1 = sum of squares); it is written back to
    HBM once at the end of the grid.
    """
    need_mask = (n_rows % tile_n) != 0

    def kernel(x_ref, stat_ref):
        i = pl.program_id(0)

        @pl.when(i == 0)
        def _():
            stat_ref[...] = jnp.zeros_like(stat_ref)

        x = x_ref[...]
        if need_mask:
            # Ragged last block: zero rows past the end of the array so the
            # undefined padding never reaches the accumulator.
            rows = i * tile_n + jax.lax.broadcasted_iota(jnp.int32, x.shape, 0)
            x = jnp.where(rows < n_rows, x, 0.0)

        stat_ref[0:1, :] += jnp.sum(x, axis=0, keepdims=True)
        stat_ref[1:2, :] += jnp.sum(x * x, axis=0, keepdims=True)

    return kernel


def _normalize_kernel(x_ref, ms_ref, y_ref):
    """y = (x - mean) * inv_std.  ms_ref row 0 = mean, row 1 = inv_std."""
    y_ref[...] = (x_ref[...] - ms_ref[0:1, :]) * ms_ref[1:2, :]


# ---------------------------------------------------------------------------
# Tiling helpers
# ---------------------------------------------------------------------------

def _fold_factor(n: int, f: int) -> int:
    """Smallest k with (k*f) % 128 == 0; used only when it divides n."""
    if f % 128 == 0:
        return 1
    k = 128 // math.gcd(f, 128)
    return k if (k <= n and n % k == 0) else 1


def _pick_tile_n(n_rows: int, f_lane: int) -> int:
    """Rows per (rows, f_lane) block.

    Budget: double-buffered x + y f32 blocks must stay well inside the smallest
    scoped-VMEM default (16 MiB on v5e, 32 MiB on v6e/v7x).  The cap also keeps
    the grid long enough for pipelining and megacore sharding on large N.
    """
    budget = 8 * 1024 * 1024                       # bytes for 2 bufs * (x + y)
    max_rows = budget // (2 * 2 * 4 * f_lane)
    max_rows = max(8, (max_rows // 8) * 8)
    tile = min(max_rows, 2048)
    if n_rows <= tile:
        return n_rows                               # single full-extent block
    return tile                                     # multiple of 8


# ---------------------------------------------------------------------------
# Functional forward
# ---------------------------------------------------------------------------

def normalizer_forward(x, acc_sum, acc_sum_squared, acc_count, num_accumulations,
                       *, mode=True, max_accumulations=10 ** 6, std_epsilon=1e-8):
    """Returns (normalized_x, (new_sum, new_sq, new_count, new_num))."""
    x = jnp.asarray(x, jnp.float32)
    n, f = x.shape
    training = (mode == 'train')                    # trace-time specialization

    acc_count = jnp.asarray(acc_count, jnp.int32)
    num_acc = jnp.asarray(num_accumulations, jnp.int32)
    acc_sum = jnp.asarray(acc_sum, jnp.float32)
    acc_sq = jnp.asarray(acc_sum_squared, jnp.float32)

    # Fold batch rows into lanes for small F (free row-major reshape).
    k = _fold_factor(n, f)
    n_rows, f_lane = n // k, k * f
    x_fold = x.reshape(n_rows, f_lane)

    tile_n = _pick_tile_n(n_rows, f_lane)
    grid = (pl.cdiv(n_rows, tile_n),)
    x_spec = pl.BlockSpec((tile_n, f_lane), lambda i: (i, 0))
    stat_spec = pl.BlockSpec((2, f_lane), lambda i: (0, 0))

    if training:
        # ---- pass 1: fused batch sum / sum-of-squares (Pallas reduction) ----
        stats_fold = pl.pallas_call(
            _make_reduce_kernel(tile_n, n_rows),
            out_shape=jax.ShapeDtypeStruct((2, f_lane), jnp.float32),
            grid=grid,
            in_specs=[x_spec],
            out_specs=stat_spec,
            compiler_params=pltpu.CompilerParams(
                dimension_semantics=("arbitrary",)),
            cost_estimate=pl.CostEstimate(
                flops=3 * n_rows * f_lane, transcendentals=0,
                bytes_accessed=(n_rows * f_lane + 2 * f_lane) * 4),
        )(x_fold)
        # Unfold the k lane copies back to the true (2, F) batch statistics.
        batch_stats = stats_fold.reshape(2, k, f).sum(axis=1)

        gate_i = (num_acc < jnp.int32(max_accumulations)).astype(jnp.int32)
        gate_f = gate_i.astype(jnp.float32)
        new_sum = acc_sum + gate_f * batch_stats[0:1, :]
        new_sq = acc_sq + gate_f * batch_stats[1:2, :]
        new_count = acc_count + gate_i * jnp.int32(n)
        new_num = num_acc + gate_i
    else:
        new_sum, new_sq = acc_sum, acc_sq
        new_count, new_num = acc_count, num_acc

    # ---- tiny (1, F) stat math stays in the wrapper (off the hot path) ----
    safe = jnp.maximum(new_count.astype(jnp.float32), 1.0)
    mean = new_sum / safe
    # Clamp variance at 0 before sqrt: avoids NaN from f32 cancellation
    # (reference would produce NaN in that degenerate case).
    var = jnp.maximum(new_sq / safe - mean * mean, 0.0)
    std = jnp.maximum(jnp.sqrt(var), jnp.float32(std_epsilon))
    inv_std = 1.0 / std
    ms_fold = jnp.concatenate(
        [jnp.tile(mean, (1, k)), jnp.tile(inv_std, (1, k))], axis=0)   # (2, k*F)

    # ---- pass 2: normalize; pure VPU sub+mul hot loop, lane-dense stores ----
    y_fold = pl.pallas_call(
        _normalize_kernel,
        out_shape=jax.ShapeDtypeStruct((n_rows, f_lane), jnp.float32),
        grid=grid,
        in_specs=[x_spec, stat_spec],
        out_specs=x_spec,
        compiler_params=pltpu.CompilerParams(
            dimension_semantics=("parallel",)),
        cost_estimate=pl.CostEstimate(
            flops=2 * n_rows * f_lane, transcendentals=0,
            bytes_accessed=(2 * n_rows * f_lane + 2 * f_lane) * 4),
    )(x_fold, ms_fold)
    y = y_fold.reshape(n, f)

    return y, (new_sum, new_sq, new_count, new_num)


# ---------------------------------------------------------------------------
# Stateful wrapper mirroring the PyTorch module
# ---------------------------------------------------------------------------

class Normalizer:
    """Stateful wrapper mirroring the PyTorch Normalizer."""

    def __init__(self, size, max_accumulations=10 ** 6, std_epsilon=1e-8, name='Normalizer'):
        self.name = name
        self.size = size
        self.max_accumulations = max_accumulations
        self.std_epsilon = std_epsilon
        # Counters kept as exact int32 (f32 loses exactness past 2^24).
        self.acc_count = jnp.int32(0)
        self.num_accumulations = jnp.int32(0)
        self.acc_sum = jnp.zeros((1, size), dtype=jnp.float32)
        self.acc_sum_squared = jnp.zeros((1, size), dtype=jnp.float32)

    def forward(self, batched_data, mode=True):
        y, (s, sq, cnt, num) = normalizer_forward(
            batched_data, self.acc_sum, self.acc_sum_squared,
            self.acc_count, self.num_accumulations,
            mode=mode, max_accumulations=self.max_accumulations,
            std_epsilon=self.std_epsilon)
        self.acc_sum, self.acc_sum_squared = s, sq
        self.acc_count, self.num_accumulations = cnt, num
        return y

    def inverse(self, normalized_batch_data):
        # Trivial F-sized math; done with plain jnp (not worth a kernel).
        safe = jnp.maximum(self.acc_count.astype(jnp.float32), 1.0)
        mean = self.acc_sum / safe
        var = jnp.maximum(self.acc_sum_squared / safe - mean ** 2, 0.0)
        std = jnp.maximum(jnp.sqrt(var), self.std_epsilon)
        return normalized_batch_data * std + mean

    def get_variable(self):
        return {'_max_accumulations': self.max_accumulations,
                '_std_epsilon': self.std_epsilon,
                '_acc_count': jnp.float32(self.acc_count),
                '_num_accumulations': jnp.float32(self.num_accumulations),
                '_acc_sum': self.acc_sum,
                '_acc_sum_squared': self.acc_sum_squared,
                'name': self.name}


# ---------------------------------------------------------------------------
# Pure-JAX reference (mirrors the torch semantics) + self-test
# ---------------------------------------------------------------------------

def _reference_forward(x, acc_sum, acc_sq, acc_count, num_acc, mode, max_acc, eps):
    if mode == 'train' and float(num_acc) < max_acc:
        acc_sum = acc_sum + jnp.sum(x, axis=0, keepdims=True)
        acc_sq = acc_sq + jnp.sum(x ** 2, axis=0, keepdims=True)
        acc_count = acc_count + x.shape[0]
        num_acc = num_acc + 1
    safe = jnp.maximum(acc_count, 1.0)
    mean = acc_sum / safe
    std = jnp.maximum(jnp.sqrt(acc_sq / safe - mean ** 2), eps)
    return (x - mean) / std, (acc_sum, acc_sq, acc_count, num_acc)


if __name__ == "__main__":
    key = jax.random.PRNGKey(0)
    batch, size = 8, 32
    k1, k2 = jax.random.split(key)
    x1 = jax.random.normal(k1, (batch, size), dtype=jnp.float32) * 2.0 + 1.5
    x2 = jax.random.normal(k2, (batch, size), dtype=jnp.float32) * 0.5 - 3.0

    norm = Normalizer(size)

    y1 = norm.forward(x1, mode='train')   # accumulate + normalize
    y2 = norm.forward(x2, mode='train')   # accumulate more + normalize
    y3 = norm.forward(x1, mode=True)      # eval: normalize only
    jax.block_until_ready((y1, y2, y3))

    # cross-check against the pure-JAX reference
    rs = (jnp.zeros((1, size), jnp.float32), jnp.zeros((1, size), jnp.float32),
          jnp.float32(0.0), jnp.float32(0.0))
    r1, rs = _reference_forward(x1, *rs, 'train', 10 ** 6, 1e-8)
    r2, rs = _reference_forward(x2, *rs, 'train', 10 ** 6, 1e-8)
    r3, rs = _reference_forward(x1, *rs, True, 10 ** 6, 1e-8)

    assert jnp.allclose(y1, r1, atol=1e-5, rtol=1e-5)
    assert jnp.allclose(y2, r2, atol=1e-5, rtol=1e-5)
    assert jnp.allclose(y3, r3, atol=1e-5, rtol=1e-5)
    assert jnp.allclose(norm.acc_sum, rs[0], atol=1e-5, rtol=1e-5)
    assert jnp.allclose(norm.acc_sum_squared, rs[1], atol=1e-5, rtol=1e-5)
    assert int(norm.acc_count) == int(rs[2])
    assert int(norm.num_accumulations) == int(rs[3])

    print("KERNEL_OK")
</pallas_src>

<mosaic_0001>
module attributes {stable_mosaic.version = 11 : i64} {
  func.func @kernel(%arg0: i32, %arg1: memref<2x128xf32, #tpu.memory_space<vmem>>, %arg2: memref<2x128xf32, #tpu.memory_space<vmem>>) attributes {dimension_semantics = [#tpu.dimension_semantics<arbitrary>], iteration_bounds = array<i64: 1>, scalar_prefetch = 0 : i64, scratch_operands = 0 : i64, tpu.core_type = #tpu.core_type<tc>, window_params = [{transform_indices = @transform_0, window_bounds = array<i64: 2, 128>}, {pipeline_mode = #tpu.pipeline_mode<synchronous>, transform_indices = @transform_1, window_bounds = array<i64: 2, 128>}]} {
    %c0_i32 = arith.constant 0 : i32
    %0 = arith.cmpi eq, %arg0, %c0_i32 : i32
    %1 = arith.extui %0 : i1 to i32
    %c0_i32_0 = arith.constant 0 : i32
    %2 = arith.cmpi ne, %1, %c0_i32_0 : i32
    scf.if %2 {
      %cst_10 = arith.constant 0.000000e+00 : f32
      %15 = vector.broadcast %cst_10 : f32 to vector<2x128xf32>
      %c0_11 = arith.constant 0 : index
      %c0_12 = arith.constant 0 : index
      %16 = vector.load %arg2[%c0_11, %c0_12] : memref<2x128xf32, #tpu.memory_space<vmem>>, vector<2x128xf32>
      tpu.vector_store %arg2[%c0_11, %c0_12], %15 {strides = array<i32>} : memref<2x128xf32, #tpu.memory_space<vmem>>, vector<2x128xf32>,
    } else {
    }
    %c0 = arith.constant 0 : index
    %c0_1 = arith.constant 0 : index
    %3 = vector.load %arg1[%c0, %c0_1] : memref<2x128xf32, #tpu.memory_space<vmem>>, vector<2x128xf32>
    %c0_2 = arith.constant 0 : index
    %c0_3 = arith.constant 0 : index
    %4 = vector.load %arg2[%c0_2, %c0_3] : memref<2x128xf32, #tpu.memory_space<vmem>>, vector<1x128xf32>
    %cst = arith.constant dense<0.000000e+00> : vector<128xf32>
    %5 = vector.multi_reduction <add>, %3, %cst [0] : vector<2x128xf32> to vector<128xf32>
    %6 = vector.shape_cast %5 : vector<128xf32> to vector<1x128xf32>
    %7 = arith.addf %4, %6 : vector<1x128xf32>
    %c0_4 = arith.constant 0 : index
    %c0_5 = arith.constant 0 : index
    %8 = vector.load %arg2[%c0_4, %c0_5] : memref<2x128xf32, #tpu.memory_space<vmem>>, vector<1x128xf32>
    tpu.vector_store %arg2[%c0_4, %c0_5], %7 {strides = array<i32>} : memref<2x128xf32, #tpu.memory_space<vmem>>, vector<1x128xf32>,
    %c1 = arith.constant 1 : index
    %c0_6 = arith.constant 0 : index
    %9 = vector.load %arg2[%c1, %c0_6] : memref<2x128xf32, #tpu.memory_space<vmem>>, vector<1x128xf32>
    %10 = arith.mulf %3, %3 : vector<2x128xf32>
    %cst_7 = arith.constant dense<0.000000e+00> : vector<128xf32>
    %11 = vector.multi_reduction <add>, %10, %cst_7 [0] : vector<2x128xf32> to vector<128xf32>
    %12 = vector.shape_cast %11 : vector<128xf32> to vector<1x128xf32>
    %13 = arith.addf %9, %12 : vector<1x128xf32>
    %c1_8 = arith.constant 1 : index
    %c0_9 = arith.constant 0 : index
    %14 = vector.load %arg2[%c1_8, %c0_9] : memref<2x128xf32, #tpu.memory_space<vmem>>, vector<1x128xf32>
    tpu.vector_store %arg2[%c1_8, %c0_9], %13 {strides = array<i32>} : memref<2x128xf32, #tpu.memory_space<vmem>>, vector<1x128xf32>,
    return
  }
  func.func @transform_0(%arg0: i32) -> (i32, i32) {
    %c0_i32 = arith.constant 0 : i32
    %c0_i32_0 = arith.constant 0 : i32
    return %arg0, %c0_i32 : i32, i32
  }
  func.func @transform_1(%arg0: i32) -> (i32, i32) {
    %c0_i32 = arith.constant 0 : i32
    %c0_i32_0 = arith.constant 0 : i32
    %c0_i32_1 = arith.constant 0 : i32
    return %c0_i32, %c0_i32_0 : i32, i32
  }
}

</mosaic_0001>

<llo_original>
// kernel: tpu_custom_call.1
$region0: #{tpu_custom_call.1}
  #allocation0 [shape = 'u32[]', space=smem, size = 0x4, offset = 0x4, fixed_abs, tag = 'smem constant byte address 0x4 - core index']
  #allocation1 [shape = 'u32[144,128]{1,0:T(1,128)}', space=vmem, size = 0x12000, scoped, tag = 'internal scratch']
  %s0 = inlined_call_operand.hbm [shape: f32[2,128], index: 0, kind: input, shape index: {}]
  %s1 = inlined_call_operand.hbm [shape: f32[2,128], index: 1, kind: output, shape index: {}]
  %s2 = sld [smem:[#allocation0]]
  $region22: #{tpu_custom_call.1} parent=0
    _
  %s4 = ssub.s32 1, %s2
  %s5 = scalar_select 0, %s4, %s2
  $region1: #{tpu_custom_call.1} parent=0
    #allocation2 [shape = 'u8[1024]{0}', space=vmem, size = 0x400, scoped, tag = 'input window, operand 0, single buffered']
    #allocation3 [shape = 's32[1]{0}', space=sflag, size = 0x4, scoped, tag = 'scoped memory for tpu_custom_call.1']
    #allocation4 [shape = 's32[1]{0}', space=sflag, size = 0x4, scoped, tag = 'scoped memory for tpu_custom_call.1']
    #allocation5 [shape = 'u8[1024]{0}', space=vmem, size = 0x400, scoped, tag = 'output window, operand 0, single buffered']
    %6 = vsyncpa [#allocation3], 0
    %7 = vsyncpa [#allocation4], 0
    // Predicated region
    $region2: #{tpu_custom_call.1} parent=1 // pred_check
      _
    $region3: #{tpu_custom_call.1} parent=1 // pred_check_branch
      %9 = sbr.rel (0) target = $region5
    $region4: #{tpu_custom_call.1} parent=1 // pred_region
      %s11 = ssub.s32 32, 32
      %12 = vsyncadd [#allocation3], %s11
      %s14 = sshll.u32 [#allocation2], 4
      %s15 = int_to_ptr.vmem [resolvable:$true] %s14
      %17 = dma.hbm_to_vmem [thread:$0]  %s0, 32, %s15, [#allocation3]
    $region5: #{tpu_custom_call.1} parent=1 // pred_fallthru
      _
    // Predicated region
    $region6: #{tpu_custom_call.1} parent=1 // pred_check
      _
    $region7: #{tpu_custom_call.1} parent=1 // pred_check_branch
      %19 = sbr.rel (0) target = $region9
    $region8: #{tpu_custom_call.1} parent=1 // pred_region
      %20 = dma.done [#allocation3], 32
    $region9: #{tpu_custom_call.1} parent=1 // pred_fallthru
      _
    %p21 = scmp.eq.s32.totalorder 0, 0
    // Predicated region
    $region10: #{tpu_custom_call.1} parent=1 // pred_check
      %p22 = pneg %p21
    $region11: #{tpu_custom_call.1} parent=1 // pred_check_branch
      %24 = sbr.rel (%p22) target = $region13
    $region12: #{tpu_custom_call.1} parent=1 // pred_region
      %25 = vst [vmem:[#allocation5] sm:$0x3] 0.0
    $region13: #{tpu_custom_call.1} parent=1 // pred_fallthru
      _
    %v26 = vld [vmem:[#allocation2] sm:$0x3]
    %v27 = vld [vmem:[#allocation5] sm:$0x1]
    %vm28 = vcmask 1041408
    %v29 = vsel %vm28, %v26, 0.0
    %v30 = vrot.slane %v29, 4
    %v31 = vadd.f32 %v29, %v30
    %v32 = vrot.slane %v31, 2
    %v33 = vadd.f32 %v31, %v32
    %v34 = vrot.slane %v33, 1
    %v35 = vadd.f32 %v33, %v34
    %v36 = vadd.f32 %v27, %v35
    %37 = vst [vmem:[#allocation5] sm:$0x1] %v36
    %v38 = vld [vmem:[#allocation5 + $0x1] sm:$0x1]
    %v39 = vmul.f32 %v26, %v26
    %v40 = vsel %vm28, %v39, 0.0
    %v41 = vrot.slane %v40, 4
    %v42 = vadd.f32 %v40, %v41
    %v43 = vrot.slane %v42, 2
    %v44 = vadd.f32 %v42, %v43
    %v45 = vrot.slane %v44, 1
    %v46 = vadd.f32 %v44, %v45
    %v47 = vadd.f32 %v38, %v46
    %48 = vst [vmem:[#allocation5 + $0x1] sm:$0x1] %v47
    // Predicated region
    $region14: #{tpu_custom_call.1} parent=1 // pred_check
      _
    $region15: #{tpu_custom_call.1} parent=1 // pred_check_branch
      %50 = sbr.rel (0) target = $region17
    $region16: #{tpu_custom_call.1} parent=1 // pred_region
      %s52 = ssub.s32 32, 32
      %53 = vsyncadd [#allocation4], %s52
      %s55 = sshll.u32 [#allocation5], 4
      %s56 = int_to_ptr.vmem [resolvable:$true] %s55
      %58 = dma.vmem_to_hbm [thread:$0]  %s56, 32, %s1, [#allocation4]
    $region17: #{tpu_custom_call.1} parent=1 // pred_fallthru
      _
    // Predicated region
    $region18: #{tpu_custom_call.1} parent=1 // pred_check
      _
    $region19: #{tpu_custom_call.1} parent=1 // pred_check_branch
      %60 = sbr.rel (0) target = $region21
    $region20: #{tpu_custom_call.1} parent=1 // pred_region
      %61 = dma.done [#allocation4], 32
    $region21: #{tpu_custom_call.1} parent=1 // pred_fallthru
      _
    %62 = vsyncpa [#allocation3], 1
    %63 = vsyncpa [#allocation4], 1

</llo_original>
